<compile_context>
chip_gen: v5e
topology: v5e:2x2
jax: 0.10.0
libtpu: 0.0.40
codegen_flags: <defaults>
</compile_context>

<pallas_src>
import jax
import jax.numpy as jnp
from jax import lax
from jax.experimental import pallas as pl
from jax.experimental.pallas import tpu as pltpu


def graphsage_head_kernel(w_ref, e_ref, out_ref):
    # w_ref: [C, E] f32 (tiny, resident across the grid).
    # e_ref: [TN, E] f32 contiguous node tile (one straight-line HBM read).
    # NT matmul on the MXU: contract E of both operands -> scores [C, TN], lane-dense.
    scores = lax.dot_general(
        w_ref[...], e_ref[...],
        dimension_numbers=(((1,), (1,)), ((), ())),
        preferred_element_type=jnp.float32,
    )
    # Numerically stable log-softmax over classes. Axis 0 is the C-row sublane axis,
    # so max/sum are cheap sublane reductions and exp runs on fully lane-dense vregs.
    m = jnp.max(scores, axis=0, keepdims=True)
    shifted = scores - m
    lse = jnp.log(jnp.sum(jnp.exp(shifted), axis=0, keepdims=True))
    logp = shifted - lse                                   # [C, TN]
    # Single in-kernel transpose to the module's [nodes, classes] layout; the XLU
    # relayout + narrow stores hide under the dominant embeds DMA, and the wrapper
    # no longer needs a separate transpose pass over HBM.
    out_ref[...] = logp.T.astype(out_ref.dtype)
    # TODO(synk): fusing the NLL / cross-entropy (labels via scalar prefetch in SMEM)
    # would remove most of this output write as well.


def supervised_graphsage_forward(weight, embeds_nm, *, block_n=4096, min_grid_steps=4):
    """Forward of SupervisedGraphSage's classification head.

    weight:    [num_classes, embed_dim] f32 (self.weight)
    embeds_nm: [num_nodes, embed_dim]   f32 node-major embeddings (== enc(nodes).T)
    returns:   [num_nodes, num_classes] f32 log-probabilities
    """
    assert block_n % 8 == 0
    num_classes, embed_dim = weight.shape
    num_nodes, embed_dim2 = embeds_nm.shape
    assert embed_dim == embed_dim2

    # Node tile: as big as block_n, but keep >= min_grid_steps grid steps when there
    # is enough work (pipeline depth + v7x 2-TC sharding of the "parallel" axis).
    tn = block_n
    if num_nodes >= min_grid_steps * 1024:
        tn = min(tn, pl.cdiv(pl.cdiv(num_nodes, min_grid_steps), 8) * 8)
    if num_nodes <= tn:
        tn = num_nodes          # single full-extent block (any N allowed by layout rules)
    grid_n = pl.cdiv(num_nodes, tn)

    # Advisory cost hint so XLA schedules the surrounding ops (encoder, loss) sensibly.
    cost = pl.CostEstimate(
        flops=2 * num_classes * embed_dim * num_nodes,
        transcendentals=num_classes * num_nodes,
        bytes_accessed=4 * (num_nodes * embed_dim
                            + num_classes * embed_dim
                            + num_nodes * num_classes),
    )

    return pl.pallas_call(
        graphsage_head_kernel,
        out_shape=jax.ShapeDtypeStruct((num_nodes, num_classes), jnp.float32),
        grid=(grid_n,),
        in_specs=[
            pl.BlockSpec((num_classes, embed_dim), lambda i: (0, 0)),  # tiny, resident
            pl.BlockSpec((tn, embed_dim), lambda i: (i, 0)),           # contiguous node tile
        ],
        out_specs=pl.BlockSpec((tn, num_classes), lambda i: (i, 0)),   # module layout [N, C]
        compiler_params=pltpu.CompilerParams(
            dimension_semantics=("parallel",),   # node axis across v7x's 2 TensorCores
        ),
        cost_estimate=cost,
    )(weight, embeds_nm)


def xavier_uniform(key, shape):
    # torch.nn.init.xavier_uniform for a [out_features, in_features] weight.
    fan_out, fan_in = shape
    bound = (6.0 / (fan_in + fan_out)) ** 0.5
    return jax.random.uniform(key, shape, jnp.float32, minval=-bound, maxval=bound)


if __name__ == "__main__":
    num_classes = 8
    embed_dim = 128
    num_nodes = 300            # deliberately not tile-aligned -> exercises the partial block
    feat_dim = 128
    num_total_nodes = 512

    key = jax.random.PRNGKey(0)
    k_w, k_enc, k_feat, k_nodes = jax.random.split(key, 4)

    # Classifier weight: nn.Parameter(FloatTensor(num_classes, embed_dim)), xavier_uniform.
    weight = xavier_uniform(k_w, (num_classes, embed_dim))

    # TODO(synk): the GraphSAGE `Encoder` (neighbor sampling + aggregation) is an external
    # module not defined in the spec; substitute a deterministic synthetic encoder
    # (linear + relu) producing node-major embeddings. Fusing that encoder matmul into this
    # kernel (so embeds never round-trip through HBM) is the next-level optimization.
    features = jax.random.normal(k_feat, (num_total_nodes, feat_dim), jnp.float32)
    enc_weight = xavier_uniform(k_enc, (embed_dim, feat_dim))
    nodes = jax.random.randint(k_nodes, (num_nodes,), 0, num_total_nodes)
    embeds_nm = jax.nn.relu(features[nodes] @ enc_weight.T)   # [N, E] node-major = enc(nodes).T

    # Reference: the module's forward in pure f32 JAX (true PyTorch semantics).
    ref = jax.nn.log_softmax(embeds_nm @ weight.T, axis=1)

    # Single-block path (default tile) and multi-step path with a partial final block.
    out_big = jax.block_until_ready(supervised_graphsage_forward(weight, embeds_nm))
    out_tiled = jax.block_until_ready(
        supervised_graphsage_forward(weight, embeds_nm, block_n=128))

    for out in (out_big, out_tiled):
        assert out.shape == (num_nodes, num_classes)
        assert jnp.allclose(out, ref, atol=2e-2, rtol=2e-2), float(jnp.max(jnp.abs(out - ref)))

    print("KERNEL_OK")
</pallas_src>

<mosaic_0001>
module attributes {stable_mosaic.version = 11 : i64} {
  func.func @graphsage_head_kernel(%arg0: i32, %arg1: memref<8x128xf32, #tpu.memory_space<vmem>>, %arg2: memref<300x128xf32, #tpu.memory_space<vmem>>, %arg3: memref<300x8xf32, #tpu.memory_space<vmem>>) attributes {dimension_semantics = [#tpu.dimension_semantics<parallel>], iteration_bounds = array<i64: 1>, scalar_prefetch = 0 : i64, scratch_operands = 0 : i64, tpu.core_type = #tpu.core_type<tc>, window_params = [{pipeline_mode = #tpu.pipeline_mode<synchronous>, transform_indices = @transform_0, window_bounds = array<i64: 8, 128>}, {transform_indices = @transform_1, window_bounds = array<i64: 300, 128>}, {transform_indices = @transform_2, window_bounds = array<i64: 300, 8>}]} {
    %c0 = arith.constant 0 : index
    %c0_0 = arith.constant 0 : index
    %0 = vector.load %arg1[%c0, %c0_0] : memref<8x128xf32, #tpu.memory_space<vmem>>, vector<8x128xf32>
    %c0_1 = arith.constant 0 : index
    %c0_2 = arith.constant 0 : index
    %1 = vector.load %arg2[%c0_1, %c0_2] : memref<300x128xf32, #tpu.memory_space<vmem>>, vector<300x128xf32>
    %cst = arith.constant dense<0.000000e+00> : vector<8x300xf32>
    %2 = tpu.matmul %0, %1, %cst {dimension_numbers = #tpu.dot_dimension_numbers<[1], [1], [0], [0], [0, 0, 1, 0], [], []>} : vector<8x128xf32>, vector<300x128xf32>, vector<8x300xf32> -> vector<8x300xf32>
    %cst_3 = arith.constant dense<0xFF800000> : vector<300xf32>
    %3 = vector.multi_reduction <maximumf>, %2, %cst_3 [0] : vector<8x300xf32> to vector<300xf32>
    %4 = vector.shape_cast %3 : vector<300xf32> to vector<1x300xf32>
    %5 = vector.broadcast %4 : vector<1x300xf32> to vector<8x300xf32>
    %6 = arith.subf %2, %5 : vector<8x300xf32>
    %7 = math.exp %6 : vector<8x300xf32>
    %cst_4 = arith.constant dense<0.000000e+00> : vector<300xf32>
    %8 = vector.multi_reduction <add>, %7, %cst_4 [0] : vector<8x300xf32> to vector<300xf32>
    %9 = vector.shape_cast %8 : vector<300xf32> to vector<1x300xf32>
    %10 = math.log %9 : vector<1x300xf32>
    %11 = vector.broadcast %10 : vector<1x300xf32> to vector<8x300xf32>
    %12 = arith.subf %6, %11 : vector<8x300xf32>
    %13 = tpu.transpose %12, [1, 0] : vector<8x300xf32> -> vector<300x8xf32>
    %c0_5 = arith.constant 0 : index
    %c0_6 = arith.constant 0 : index
    %14 = vector.load %arg3[%c0_5, %c0_6] : memref<300x8xf32, #tpu.memory_space<vmem>>, vector<300x8xf32>
    tpu.vector_store %arg3[%c0_5, %c0_6], %13 {strides = array<i32>} : memref<300x8xf32, #tpu.memory_space<vmem>>, vector<300x8xf32>,
    return
  }
  func.func @transform_0(%arg0: i32) -> (i32, i32) {
    %c0_i32 = arith.constant 0 : i32
    %c0_i32_0 = arith.constant 0 : i32
    %c0_i32_1 = arith.constant 0 : i32
    return %c0_i32, %c0_i32_0 : i32, i32
  }
  func.func @transform_1(%arg0: i32) -> (i32, i32) {
    %c0_i32 = arith.constant 0 : i32
    %c0_i32_0 = arith.constant 0 : i32
    return %arg0, %c0_i32 : i32, i32
  }
  func.func @transform_2(%arg0: i32) -> (i32, i32) {
    %c0_i32 = arith.constant 0 : i32
    %c0_i32_0 = arith.constant 0 : i32
    return %arg0, %c0_i32 : i32, i32
  }
}

</mosaic_0001>

<llo_original>
// kernel: tpu_custom_call.1
$region0: #{tpu_custom_call.1}
  #allocation0 [shape = 'u32[]', space=smem, size = 0x4, offset = 0x4, fixed_abs, tag = 'smem constant byte address 0x4 - core index']
  #allocation1 [shape = 'u32[72,128]{1,0:T(1,128)}', space=vmem, size = 0x9000, scoped, tag = 'internal scratch']
  %s0 = inlined_call_operand.hbm [shape: f32[8,128], index: 0, kind: input, shape index: {}]
  %s1 = inlined_call_operand.hbm [shape: f32[300,128], index: 1, kind: input, shape index: {}]
  %s2 = inlined_call_operand.vmem [shape: f32[300,8], index: 2, kind: output, shape index: {}]
  %s3 = sld [smem:[#allocation0]]
  $region26: #{tpu_custom_call.1} parent=0
    _
  %s5 = ssub.s32 1, %s3
  %s6 = scalar_select 0, %s5, %s3
  $region1: #{tpu_custom_call.1} parent=0
    #allocation2 [shape = 'u8[4096]{0}', space=vmem, size = 0x1000, scoped, tag = 'input window, operand 0, single buffered']
    #allocation3 [shape = 's32[1]{0}', space=sflag, size = 0x4, scoped, tag = 'scoped memory for tpu_custom_call.1']
    #allocation4 [shape = 'u8[155648]{0}', space=vmem, size = 0x26000, scoped, tag = 'input window, operand 1, single buffered']
    #allocation5 [shape = 's32[1]{0}', space=sflag, size = 0x4, scoped, tag = 'scoped memory for tpu_custom_call.1']
    %7 = vsyncpa [#allocation3], 0
    %8 = vsyncpa [#allocation5], 0
    // Predicated region
    $region2: #{tpu_custom_call.1} parent=1 // pred_check
      _
    $region3: #{tpu_custom_call.1} parent=1 // pred_check_branch
      %10 = sbr.rel (0) target = $region5
    $region4: #{tpu_custom_call.1} parent=1 // pred_region
      %12 = vsyncadd [#allocation3], 0
      %s14 = sshll.u32 %s0, 4
      %s15 = int_to_ptr.hbm [resolvable:$true] %s14
      %s16 = sshll.u32 [#allocation2], 4
      %s17 = int_to_ptr.vmem [resolvable:$true] %s16
      %19 = dma.hbm_to_vmem [thread:$0]  %s15, 128, %s17, [#allocation3]
    $region5: #{tpu_custom_call.1} parent=1 // pred_fallthru
      _
    // Predicated region
    $region6: #{tpu_custom_call.1} parent=1 // pred_check
      _
    $region7: #{tpu_custom_call.1} parent=1 // pred_check_branch
      %21 = sbr.rel (0) target = $region9
    $region8: #{tpu_custom_call.1} parent=1 // pred_region
      %23 = vsyncadd [#allocation5], 0
      %s24 = sshll.u32 %s1, 4
      %s25 = int_to_ptr.hbm [resolvable:$true] %s24
      %s26 = sshll.u32 [#allocation4], 4
      %s27 = int_to_ptr.vmem [resolvable:$true] %s26
      %32 = dma.hbm_to_vmem [thread:$0]  %s25, 4864, %s27, [#allocation5], 128, 128, 8
    $region9: #{tpu_custom_call.1} parent=1 // pred_fallthru
      _
    // Predicated region
    $region10: #{tpu_custom_call.1} parent=1 // pred_check
      _
    $region11: #{tpu_custom_call.1} parent=1 // pred_check_branch
      %34 = sbr.rel (0) target = $region13
    $region12: #{tpu_custom_call.1} parent=1 // pred_region
      %36 = dma.done [#allocation3], 128
    $region13: #{tpu_custom_call.1} parent=1 // pred_fallthru
      _
    // Predicated region
    $region14: #{tpu_custom_call.1} parent=1 // pred_check
      _
    $region15: #{tpu_custom_call.1} parent=1 // pred_check_branch
      %38 = sbr.rel (0) target = $region17
    $region16: #{tpu_custom_call.1} parent=1 // pred_region
      %40 = dma.done [#allocation5], 4864
    $region17: #{tpu_custom_call.1} parent=1 // pred_fallthru
      _
    %v41 = vld [vmem:[#allocation2] sm:$0xff]
    %v42 = vld [vmem:[#allocation4] sm:$0xff]
    %v43 = vld [vmem:[#allocation4 + $0x8] sm:$0xff]
    %v44 = vld [vmem:[#allocation4 + $0x10] sm:$0xff]
    %v45 = vld [vmem:[#allocation4 + $0x18] sm:$0xff]
    %v46 = vld [vmem:[#allocation4 + $0x20] sm:$0xff]
    %v47 = vld [vmem:[#allocation4 + $0x28] sm:$0xff]
    %v48 = vld [vmem:[#allocation4 + $0x30] sm:$0xff]
    %v49 = vld [vmem:[#allocation4 + $0x38] sm:$0xff]
    %v50 = vld [vmem:[#allocation4 + $0x40] sm:$0xff]
    %v51 = vld [vmem:[#allocation4 + $0x48] sm:$0xff]
    %v52 = vld [vmem:[#allocation4 + $0x50] sm:$0xff]
    %v53 = vld [vmem:[#allocation4 + $0x58] sm:$0xff]
    %v54 = vld [vmem:[#allocation4 + $0x60] sm:$0xff]
    %v55 = vld [vmem:[#allocation4 + $0x68] sm:$0xff]
    %v56 = vld [vmem:[#allocation4 + $0x70] sm:$0xff]
    %v57 = vld [vmem:[#allocation4 + $0x78] sm:$0xff]
    %v58 = vld [vmem:[#allocation4 + $0x80] sm:$0xff]
    %v59 = vld [vmem:[#allocation4 + $0x88] sm:$0xff]
    %v60 = vld [vmem:[#allocation4 + $0x90] sm:$0xff]
    %v61 = vld [vmem:[#allocation4 + $0x98] sm:$0xff]
    %v62 = vld [vmem:[#allocation4 + $0xa0] sm:$0xff]
    %v63 = vld [vmem:[#allocation4 + $0xa8] sm:$0xff]
    %v64 = vld [vmem:[#allocation4 + $0xb0] sm:$0xff]
    %v65 = vld [vmem:[#allocation4 + $0xb8] sm:$0xff]
    %v66 = vld [vmem:[#allocation4 + $0xc0] sm:$0xff]
    %v67 = vld [vmem:[#allocation4 + $0xc8] sm:$0xff]
    %v68 = vld [vmem:[#allocation4 + $0xd0] sm:$0xff]
    %v69 = vld [vmem:[#allocation4 + $0xd8] sm:$0xff]
    %v70 = vld [vmem:[#allocation4 + $0xe0] sm:$0xff]
    %v71 = vld [vmem:[#allocation4 + $0xe8] sm:$0xff]
    %v72 = vld [vmem:[#allocation4 + $0xf0] sm:$0xff]
    %v73 = vld [vmem:[#allocation4 + $0xf8] sm:$0xff]
    %v74 = vld [vmem:[#allocation4 + $0x100] sm:$0xff]
    %v75 = vld [vmem:[#allocation4 + $0x108] sm:$0xff]
    %v76 = vld [vmem:[#allocation4 + $0x110] sm:$0xff]
    %v77 = vld [vmem:[#allocation4 + $0x118] sm:$0xff]
    %v78 = vld [vmem:[#allocation4 + $0x120] sm:$0xff]
    %v79 = vld [vmem:[#allocation4 + $0x128] sm:$0xf]
    %80 = vmatpush.xpose.msra.mxu0 %v57
    %81 = vmatpush.xpose.msra.mxu0 %v56
    %82 = vmatpush.xpose.msra.mxu0 %v55
    %83 = vmatpush.xpose.msra.mxu0 %v54
    %84 = vmatpush.xpose.msra.mxu0 %v53
    %85 = vmatpush.xpose.msra.mxu0 %v52
    %86 = vmatpush.xpose.msra.mxu0 %v51
    %87 = vmatpush.xpose.msra.mxu0 %v50
    %88 = vmatpush.xpose.msra.mxu0 %v49
    %89 = vmatpush.xpose.msra.mxu0 %v48
    %90 = vmatpush.xpose.msra.mxu0 %v47
    %91 = vmatpush.xpose.msra.mxu0 %v46
    %92 = vmatpush.xpose.msra.mxu0 %v45
    %93 = vmatpush.xpose.msra.mxu0 %v44
    %94 = vmatpush.xpose.msra.mxu0 %v43
    %95 = vmatpush.xpose.msra.mxu0 %v42
    %96 = vmatmul.f32.gmra.mxu0 %v41
    %v97 = vpop.f32.mrf.mxu0
    %v98 = vadd.f32 0.0, %v97
    %99 = vdwg.mxu0
    %100 = vmatpush.xpose.msra.mxu0 %v73
    %101 = vmatpush.xpose.msra.mxu0 %v72
    %102 = vmatpush.xpose.msra.mxu0 %v71
    %103 = vmatpush.xpose.msra.mxu0 %v70
    %104 = vmatpush.xpose.msra.mxu0 %v69
    %105 = vmatpush.xpose.msra.mxu0 %v68
    %106 = vmatpush.xpose.msra.mxu0 %v67
    %107 = vmatpush.xpose.msra.mxu0 %v66
    %108 = vmatpush.xpose.msra.mxu0 %v65
    %109 = vmatpush.xpose.msra.mxu0 %v64
    %110 = vmatpush.xpose.msra.mxu0 %v63
    %111 = vmatpush.xpose.msra.mxu0 %v62
    %112 = vmatpush.xpose.msra.mxu0 %v61
    %113 = vmatpush.xpose.msra.mxu0 %v60
    %114 = vmatpush.xpose.msra.mxu0 %v59
    %115 = vmatpush.xpose.msra.mxu0 %v58
    %116 = vmatmul.f32.gmra.mxu0 %v41
    %v117 = vpop.f32.mrf.mxu0
    %v118 = vadd.f32 0.0, %v117
    %119 = vdwg.mxu0
    %120 = vmatpush.xpose.msra.mxu0 0.0
    %121 = vmatpush.xpose.msra.mxu0 0.0
    %122 = vmatpush.xpose.msra.mxu0 0.0
    %123 = vmatpush.xpose.msra.mxu0 0.0
    %124 = vmatpush.xpose.msra.mxu0 0.0
    %125 = vmatpush.xpose.msra.mxu0 0.0
    %126 = vmatpush.xpose.msra.mxu0 0.0
    %127 = vmatpush.xpose.msra.mxu0 0.0
    %128 = vmatpush.xpose.msra.mxu0 0.0
    %129 = vmatpush.xpose.msra.mxu0 0.0
    %130 = vmatpush.xpose.msra.mxu0 %v79
    %131 = vmatpush.xpose.msra.mxu0 %v78
    %132 = vmatpush.xpose.msra.mxu0 %v77
    %133 = vmatpush.xpose.msra.mxu0 %v76
    %134 = vmatpush.xpose.msra.mxu0 %v75
    %135 = vmatpush.xpose.msra.mxu0 %v74
    %136 = vmatmul.f32.gmra.mxu0 %v41
    %v137 = vpop.f32.mrf.mxu0
    %v138 = vadd.f32 0.0, %v137
    %139 = vdwg.mxu0
    %v140 = vrot.slane %v98, 4
    %v141 = vmax.f32 %v98, %v140
    %v142 = vrot.slane %v141, 2
    %v143 = vmax.f32 %v141, %v142
    %v144 = vrot.slane %v143, 1
    %v145 = vmax.f32 %v143, %v144
    %v146 = vrot.slane %v118, 4
    %v147 = vmax.f32 %v118, %v146
    %v148 = vrot.slane %v147, 2
    %v149 = vmax.f32 %v147, %v148
    %v150 = vrot.slane %v149, 1
    %v151 = vmax.f32 %v149, %v150
    %vm152 = vcmask 359424
    %v153 = vsel %vm152, %v138, -inf
    %v154 = vrot.slane %v153, 4
    %v155 = vmax.f32 %v153, %v154
    %v156 = vrot.slane %v155, 2
    %v157 = vmax.f32 %v155, %v156
    %v158 = vrot.slane %v157, 1
    %v159 = vmax.f32 %v157, %v158
    %v160 = vsub.f32 %v98, %v145
    %v161 = vsub.f32 %v118, %v151
    %v162 = vsub.f32 %v138, %v159
    %v163 = vmul.f32 %v160, 1.442695
    %v164 = vpow.pop %v163
    %v165 = vmul.f32 %v161, 1.442695
    %v166 = vpow.pop %v165
    %v167 = vmul.f32 %v162, 1.442695
    %v168 = vpow.pop %v167
    %v169 = vrot.slane %v164, 4
    %v170 = vadd.f32 %v164, %v169
    %v171 = vrot.slane %v170, 2
    %v172 = vadd.f32 %v170, %v171
    %v173 = vrot.slane %v172, 1
    %v174 = vadd.f32 %v172, %v173
    %v175 = vrot.slane %v166, 4
    %v176 = vadd.f32 %v166, %v175
    %v177 = vrot.slane %v176, 2
    %v178 = vadd.f32 %v176, %v177
    %v179 = vrot.slane %v178, 1
    %v180 = vadd.f32 %v178, %v179
    %v181 = vsel %vm152, %v168, 0.0
    %v182 = vrot.slane %v181, 4
    %v183 = vadd.f32 %v181, %v182
    %v184 = vrot.slane %v183, 2
    %v185 = vadd.f32 %v183, %v184
    %v186 = vrot.slane %v185, 1
    %v187 = vadd.f32 %v185, %v186
    %v188 = vlog2.pop %v174
    %v189 = vmul.f32 %v188, 0.6931472
    %v190 = vlog2.pop %v180
    %v191 = vmul.f32 %v190, 0.6931472
    %v192 = vlog2.pop %v187
    %v193 = vmul.f32 %v192, 0.6931472
    %v194 = vsub.f32 %v160, %v189
    %v195 = vsub.f32 %v161, %v191
    %v196 = vsub.f32 %v162, %v193
    %197 = vxpose.xlu0.b32.start [1/16] %v194, 128
    %198 = vxpose.xlu0.b32.cont [2/16] 0.0, 128
    %199 = vxpose.xlu0.b32.cont [3/16] 0.0, 128
    %200 = vxpose.xlu0.b32.cont [4/16] 0.0, 128
    %201 = vxpose.xlu0.b32.cont [5/16] 0.0, 128
    %202 = vxpose.xlu0.b32.cont [6/16] 0.0, 128
    %203 = vxpose.xlu0.b32.cont [7/16] 0.0, 128
    %204 = vxpose.xlu0.b32.cont [8/16] 0.0, 128
    %205 = vxpose.xlu0.b32.cont [9/16] 0.0, 128
    %206 = vxpose.xlu0.b32.cont [10/16] 0.0, 128
    %207 = vxpose.xlu0.b32.cont [11/16] 0.0, 128
    %208 = vxpose.xlu0.b32.cont [12/16] 0.0, 128
    %209 = vxpose.xlu0.b32.cont [13/16] 0.0, 128
    %210 = vxpose.xlu0.b32.cont [14/16] 0.0, 128
    %211 = vxpose.xlu0.b32.cont [15/16] 0.0, 128
    %212 = vxpose.xlu0.b32.end [16/16] 0.0, 128
    %v213 = vpop.trf.xlu0
    %v214 = vpop.trf.xlu0
    %v215 = vpop.trf.xlu0
    %v216 = vpop.trf.xlu0
    %v217 = vpop.trf.xlu0
    %v218 = vpop.trf.xlu0
    %v219 = vpop.trf.xlu0
    %v220 = vpop.trf.xlu0
    %v221 = vpop.trf.xlu0
    %v222 = vpop.trf.xlu0
    %v223 = vpop.trf.xlu0
    %v224 = vpop.trf.xlu0
    %v225 = vpop.trf.xlu0
    %v226 = vpop.trf.xlu0
    %v227 = vpop.trf.xlu0
    %v228 = vpop.trf.xlu0
    %229 = vxpose.xlu0.b32.start [1/16] %v195, 128
    %230 = vxpose.xlu0.b32.cont [2/16] 0.0, 128
    %231 = vxpose.xlu0.b32.cont [3/16] 0.0, 128
    %232 = vxpose.xlu0.b32.cont [4/16] 0.0, 128
    %233 = vxpose.xlu0.b32.cont [5/16] 0.0, 128
    %234 = vxpose.xlu0.b32.cont [6/16] 0.0, 128
    %235 = vxpose.xlu0.b32.cont [7/16] 0.0, 128
    %236 = vxpose.xlu0.b32.cont [8/16] 0.0, 128
    %237 = vxpose.xlu0.b32.cont [9/16] 0.0, 128
    %238 = vxpose.xlu0.b32.cont [10/16] 0.0, 128
    %239 = vxpose.xlu0.b32.cont [11/16] 0.0, 128
    %240 = vxpose.xlu0.b32.cont [12/16] 0.0, 128
    %241 = vxpose.xlu0.b32.cont [13/16] 0.0, 128
    %242 = vxpose.xlu0.b32.cont [14/16] 0.0, 128
    %243 = vxpose.xlu0.b32.cont [15/16] 0.0, 128
    %244 = vxpose.xlu0.b32.end [16/16] 0.0, 128
    %v245 = vpop.trf.xlu0
    %v246 = vpop.trf.xlu0
    %v247 = vpop.trf.xlu0
    %v248 = vpop.trf.xlu0
    %v249 = vpop.trf.xlu0
    %v250 = vpop.trf.xlu0
    %v251 = vpop.trf.xlu0
    %v252 = vpop.trf.xlu0
    %v253 = vpop.trf.xlu0
    %v254 = vpop.trf.xlu0
    %v255 = vpop.trf.xlu0
    %v256 = vpop.trf.xlu0
    %v257 = vpop.trf.xlu0
    %v258 = vpop.trf.xlu0
    %v259 = vpop.trf.xlu0
    %v260 = vpop.trf.xlu0
    %261 = vxpose.xlu0.b32.start [1/16] %v196, 128
    %262 = vxpose.xlu0.b32.cont [2/16] 0.0, 128
    %263 = vxpose.xlu0.b32.cont [3/16] 0.0, 128
    %264 = vxpose.xlu0.b32.cont [4/16] 0.0, 128
    %265 = vxpose.xlu0.b32.cont [5/16] 0.0, 128
    %266 = vxpose.xlu0.b32.cont [6/16] 0.0, 128
    %267 = vxpose.xlu0.b32.cont [7/16] 0.0, 128
    %268 = vxpose.xlu0.b32.cont [8/16] 0.0, 128
    %269 = vxpose.xlu0.b32.cont [9/16] 0.0, 128
    %270 = vxpose.xlu0.b32.cont [10/16] 0.0, 128
    %271 = vxpose.xlu0.b32.cont [11/16] 0.0, 128
    %272 = vxpose.xlu0.b32.cont [12/16] 0.0, 128
    %273 = vxpose.xlu0.b32.cont [13/16] 0.0, 128
    %274 = vxpose.xlu0.b32.cont [14/16] 0.0, 128
    %275 = vxpose.xlu0.b32.cont [15/16] 0.0, 128
    %276 = vxpose.xlu0.b32.end [16/16] 0.0, 128
    %v277 = vpop.trf.xlu0
    %v278 = vpop.trf.xlu0
    %v279 = vpop.trf.xlu0
    %v280 = vpop.trf.xlu0
    %v281 = vpop.trf.xlu0
    %v282 = vpop.trf.xlu0
    %v283 = vpop.trf.xlu0
    %v284 = vpop.trf.xlu0
    %v285 = vpop.trf.xlu0
    %v286 = vpop.trf.xlu0
    %v287 = vpop.trf.xlu0
    %v288 = vpop.trf.xlu0
    %v289 = vpop.trf.xlu0
    %v290 = vpop.trf.xlu0
    %v291 = vpop.trf.xlu0
    %v292 = vpop.trf.xlu0
    %vm293 = vcmask 64512
    %294 = vst.msk [vmem:[%s2] sm:$0xff] %vm293, %v213
    %295 = vst.msk [vmem:[%s2 + $0x8] sm:$0xff] %vm293, %v214
    %296 = vst.msk [vmem:[%s2 + $0x10] sm:$0xff] %vm293, %v215
    %297 = vst.msk [vmem:[%s2 + $0x18] sm:$0xff] %vm293, %v216
    %298 = vst.msk [vmem:[%s2 + $0x20] sm:$0xff] %vm293, %v217
    %299 = vst.msk [vmem:[%s2 + $0x28] sm:$0xff] %vm293, %v218
    %300 = vst.msk [vmem:[%s2 + $0x30] sm:$0xff] %vm293, %v219
    %301 = vst.msk [vmem:[%s2 + $0x38] sm:$0xff] %vm293, %v220
    %302 = vst.msk [vmem:[%s2 + $0x40] sm:$0xff] %vm293, %v221
    %303 = vst.msk [vmem:[%s2 + $0x48] sm:$0xff] %vm293, %v222
    %304 = vst.msk [vmem:[%s2 + $0x50] sm:$0xff] %vm293, %v223
    %305 = vst.msk [vmem:[%s2 + $0x58] sm:$0xff] %vm293, %v224
    %306 = vst.msk [vmem:[%s2 + $0x60] sm:$0xff] %vm293, %v225
    %307 = vst.msk [vmem:[%s2 + $0x68] sm:$0xff] %vm293, %v226
    %308 = vst.msk [vmem:[%s2 + $0x70] sm:$0xff] %vm293, %v227
    %309 = vst.msk [vmem:[%s2 + $0x78] sm:$0xff] %vm293, %v228
    %310 = vst.msk [vmem:[%s2 + $0x80] sm:$0xff] %vm293, %v245
    %311 = vst.msk [vmem:[%s2 + $0x88] sm:$0xff] %vm293, %v246
    %312 = vst.msk [vmem:[%s2 + $0x90] sm:$0xff] %vm293, %v247
    %313 = vst.msk [vmem:[%s2 + $0x98] sm:$0xff] %vm293, %v248
    %314 = vst.msk [vmem:[%s2 + $0xa0] sm:$0xff] %vm293, %v249
    %315 = vst.msk [vmem:[%s2 + $0xa8] sm:$0xff] %vm293, %v250
    %316 = vst.msk [vmem:[%s2 + $0xb0] sm:$0xff] %vm293, %v251
    %317 = vst.msk [vmem:[%s2 + $0xb8] sm:$0xff] %vm293, %v252
    %318 = vst.msk [vmem:[%s2 + $0xc0] sm:$0xff] %vm293, %v253
    %319 = vst.msk [vmem:[%s2 + $0xc8] sm:$0xff] %vm293, %v254
    %320 = vst.msk [vmem:[%s2 + $0xd0] sm:$0xff] %vm293, %v255
    %321 = vst.msk [vmem:[%s2 + $0xd8] sm:$0xff] %vm293, %v256
    %322 = vst.msk [vmem:[%s2 + $0xe0] sm:$0xff] %vm293, %v257
    %323 = vst.msk [vmem:[%s2 + $0xe8] sm:$0xff] %vm293, %v258
    %324 = vst.msk [vmem:[%s2 + $0xf0] sm:$0xff] %vm293, %v259
    %325 = vst.msk [vmem:[%s2 + $0xf8] sm:$0xff] %vm293, %v260
    %326 = vst.msk [vmem:[%s2 + $0x100] sm:$0xff] %vm293, %v277
    %327 = vst.msk [vmem:[%s2 + $0x108] sm:$0xff] %vm293, %v278
    %328 = vst.msk [vmem:[%s2 + $0x110] sm:$0xff] %vm293, %v279
    %329 = vst.msk [vmem:[%s2 + $0x118] sm:$0xff] %vm293, %v280
    %330 = vst.msk [vmem:[%s2 + $0x120] sm:$0xff] %vm293, %v281
    %vm331 = vcmask 60416
    %332 = vst.msk [vmem:[%s2 + $0x128] sm:$0xf] %vm331, %v282
    // Predicated region
    $region18: #{tpu_custom_call.1} parent=1 // pred_check
      _
    $region19: #{tpu_custom_call.1} parent=1 // pred_check_branch
      %334 = sbr.rel (0) target = $region21
    $region20: #{tpu_custom_call.1} parent=1 // pred_region
      _
    $region21: #{tpu_custom_call.1} parent=1 // pred_fallthru
      _
    // Predicated region
    $region22: #{tpu_custom_call.1} parent=1 // pred_check
      _
    $region23: #{tpu_custom_call.1} parent=1 // pred_check_branch
      %336 = sbr.rel (0) target = $region25
    $region24: #{tpu_custom_call.1} parent=1 // pred_region
      _
    $region25: #{tpu_custom_call.1} parent=1 // pred_fallthru
      _
    %337 = vsyncpa [#allocation3], 1
    %338 = vsyncpa [#allocation5], 1

</llo_original>
